<compile_context>
chip_gen: v6e
topology: v6e:2x2x1
jax: 0.10.0
libtpu: 0.0.40
codegen_flags: <defaults>
</compile_context>

<pallas_src>
import jax
import jax.numpy as jnp
from jax.experimental import pallas as pl
from jax.experimental.pallas import tpu as pltpu

BN_EPS = 1e-5


def _round_up(n, m):
    return ((n + m - 1) // m) * m


# ---------------------------------------------------------------------------
# Pass 1: gridded over the batch.  Purely row-local compute (no batch stats).
# ---------------------------------------------------------------------------
def _dense_kernel(f_ref, w1_ref, b1_ref, w2_ref, b2_ref, h_ref):
    # dense1: Linear(1024 -> 128).  f / W1 are bf16, MXU accumulates in f32.
    x = jnp.dot(f_ref[...], w1_ref[...],
                preferred_element_type=jnp.float32) + b1_ref[...]

    # Attention block of FpModel.forward:
    #   alpha = softmax(x); out = bmm(alpha.unsqueeze(2), x.unsqueeze(1)).sum(1)
    #        == (sum_i alpha[b, i]) * x[b, :] == 1.0 * x[b, :]
    # Exact mathematical identity -> removed (per perf review: dead EUP/XLU/VPU
    # work).  x_att == x.

    # FpModel.fp Linear(128 -> 64).  BatchNorm + ReLU need whole-batch
    # statistics, so they are finalized in pass 2.
    h_ref[...] = jnp.dot(x, w2_ref[...],
                         preferred_element_type=jnp.float32) + b2_ref[...]


# ---------------------------------------------------------------------------
# Pass 2: whole-batch BatchNorm1d (training stats) + ReLU + fc + sigmoid + BCE.
# ---------------------------------------------------------------------------
def _head_kernel(h_ref, gamma_ref, beta_ref, wfc_ref, bfc_ref, label_ref,
                 prob_ref, loss_ref):
    h = h_ref[...]                                            # (B, 64) f32

    # BatchNorm1d(64), training mode: biased batch variance over the FULL batch.
    mean = jnp.mean(h, axis=0, keepdims=True)                 # (1, 64)
    var = jnp.mean((h - mean) ** 2, axis=0, keepdims=True)
    hn = (h - mean) * jax.lax.rsqrt(var + BN_EPS)
    hn = hn * gamma_ref[...] + beta_ref[...]
    hr = jnp.maximum(hn, 0.0)                                 # ReLU

    # fc: Linear(64 -> 1).  An N=1 MXU matmul wastes the array; use a VPU
    # broadcast-multiply + cross-lane (XLU) reduce instead. wfc is a (1, 64) row.
    logits = jnp.sum(hr * wfc_ref[...], axis=-1, keepdims=True) + bfc_ref[...]

    # Sigmoid: EUP exp + approximate reciprocal (divide moved off the VPU).
    # Clip to [0, 1] so the ~2^-12 approx error can never push p past 1.0
    # before the log() below.
    p = pl.reciprocal(1.0 + jnp.exp(-logits), approx=True)
    p = jnp.clip(p, 0.0, 1.0)
    prob_ref[...] = p                                         # (B, 1)

    # BCELoss (mean reduction, logs clamped at -100 like torch.nn.BCELoss).
    y = label_ref[...]                                        # (B, 1)
    logp = jnp.maximum(jnp.log(p), -100.0)
    log1mp = jnp.maximum(jnp.log(1.0 - p), -100.0)
    per = -(y * logp + (1.0 - y) * log1mp)
    loss_ref[...] = jnp.sum(per, axis=0, keepdims=True) / p.shape[0]  # (1, 1)


def init_params(key):
    ks = jax.random.split(key, 5)
    w1t = jax.random.normal(ks[0], (1024, 128), jnp.float32) * 0.02   # dense1
    b1 = jax.random.normal(ks[1], (1, 128), jnp.float32) * 0.01
    w2t = jax.random.normal(ks[2], (128, 64), jnp.float32) * 0.05     # fp linear
    b2 = jax.random.normal(ks[3], (1, 64), jnp.float32) * 0.01
    gamma = jnp.ones((1, 64), jnp.float32)                            # BN weight
    beta = jnp.zeros((1, 64), jnp.float32)                            # BN bias
    wfct = jax.random.normal(ks[4], (64, 1), jnp.float32) * 0.1       # fc
    bfc = jnp.zeros((1, 1), jnp.float32)
    return (w1t, b1, w2t, b2, gamma, beta, wfct, bfc)


def mymodel_forward(f, X, A, label, params):
    # X, A are unused by MyModel.forward (matches the PyTorch reference).
    del X, A
    B = f.shape[0]
    w1t, b1, w2t, b2, gamma, beta, wfct, bfc = params

    # bf16 for the dominant f @ W1 HBM traffic; accumulation stays f32.
    f_bf16 = f.astype(jnp.bfloat16)
    w1_bf16 = w1t.astype(jnp.bfloat16)
    wfc_row = wfct.reshape(1, 64).astype(jnp.float32)   # (1, 64) row for VPU fc
    label2 = label.reshape(B, 1).astype(jnp.float32)

    # Batch tile: multiple of 16 sublanes (bf16-friendly), capped at 512 so
    # double-buffered blocks stay comfortably inside scoped VMEM on every
    # generation (v5e 16 MiB default ... v7x 32/64 MiB).  Partial last blocks
    # are handled by Pallas (masked writeback); pass 1 is row-local so padded
    # garbage rows never affect valid outputs.
    TB = min(512, _round_up(B, 16))
    grid = (pl.cdiv(B, TB),)

    h = pl.pallas_call(
        _dense_kernel,
        out_shape=jax.ShapeDtypeStruct((B, 64), jnp.float32),
        grid=grid,
        in_specs=[
            pl.BlockSpec((TB, 1024), lambda i: (i, 0)),    # f tile (bf16)
            pl.BlockSpec((1024, 128), lambda i: (0, 0)),   # W1 (resident)
            pl.BlockSpec((1, 128), lambda i: (0, 0)),      # b1
            pl.BlockSpec((128, 64), lambda i: (0, 0)),     # W2
            pl.BlockSpec((1, 64), lambda i: (0, 0)),       # b2
        ],
        out_specs=pl.BlockSpec((TB, 64), lambda i: (i, 0)),
        compiler_params=pltpu.CompilerParams(
            dimension_semantics=("parallel",)),            # megacore on v7x
    )(f_bf16, w1_bf16, b1, w2t, b2)

    # TODO(synk): for extremely large B (h > VMEM), add a third gridded pass
    # that applies BN/fc/BCE from precomputed whole-batch mean/var partials.
    vmem = pl.BlockSpec(memory_space=pltpu.MemorySpace.VMEM)
    probs, loss = pl.pallas_call(
        _head_kernel,
        out_shape=(jax.ShapeDtypeStruct((B, 1), jnp.float32),
                   jax.ShapeDtypeStruct((1, 1), jnp.float32)),
        in_specs=[vmem] * 6,
        out_specs=(vmem, vmem),
    )(h, gamma, beta, wfc_row, bfc, label2)
    return probs[:, 0], loss[0, 0]


if __name__ == "__main__":
    B = 8
    key = jax.random.PRNGKey(0)
    k_par, k_f, k_x, k_a, k_lab = jax.random.split(key, 5)

    params = init_params(k_par)

    f = jax.random.normal(k_f, (B, 1024), jnp.float32)
    X = jax.random.normal(k_x, (B, 4, 65), jnp.float32)      # unused in forward
    A = jax.random.normal(k_a, (B, 4, 4), jnp.float32)       # unused in forward
    label = jax.random.bernoulli(k_lab, 0.5, (B,)).astype(jnp.float32)

    probs, loss = jax.jit(mymodel_forward)(f, X, A, label, params)
    probs = jax.block_until_ready(probs)
    loss = jax.block_until_ready(loss)

    assert probs.shape == (B,)
    assert loss.shape == ()
    assert bool(jnp.all(jnp.isfinite(probs))) and bool(jnp.isfinite(loss))
    assert bool(jnp.all((probs >= 0.0) & (probs <= 1.0)))
    print("KERNEL_OK")
</pallas_src>

<mosaic_0001>
module attributes {stable_mosaic.version = 11 : i64} {
  func.func @_dense_kernel(%arg0: i32, %arg1: memref<16x1024xbf16, #tpu.memory_space<vmem>>, %arg2: memref<1024x128xbf16, #tpu.memory_space<vmem>>, %arg3: memref<1x128xf32, #tpu.memory_space<vmem>>, %arg4: memref<128x64xf32, #tpu.memory_space<vmem>>, %arg5: memref<1x64xf32, #tpu.memory_space<vmem>>, %arg6: memref<16x64xf32, #tpu.memory_space<vmem>>) attributes {dimension_semantics = [#tpu.dimension_semantics<parallel>], iteration_bounds = array<i64: 1>, scalar_prefetch = 0 : i64, scratch_operands = 0 : i64, tpu.core_type = #tpu.core_type<tc>, window_params = [{transform_indices = @transform_0, window_bounds = array<i64: 16, 1024>}, {pipeline_mode = #tpu.pipeline_mode<synchronous>, transform_indices = @transform_1, window_bounds = array<i64: 1024, 128>}, {pipeline_mode = #tpu.pipeline_mode<synchronous>, transform_indices = @transform_2, window_bounds = array<i64: 1, 128>}, {pipeline_mode = #tpu.pipeline_mode<synchronous>, transform_indices = @transform_3, window_bounds = array<i64: 128, 64>}, {pipeline_mode = #tpu.pipeline_mode<synchronous>, transform_indices = @transform_4, window_bounds = array<i64: 1, 64>}, {transform_indices = @transform_5, window_bounds = array<i64: 16, 64>}]} {
    %c0 = arith.constant 0 : index
    %c0_0 = arith.constant 0 : index
    %0 = vector.load %arg1[%c0, %c0_0] : memref<16x1024xbf16, #tpu.memory_space<vmem>>, vector<16x1024xbf16>
    %c0_1 = arith.constant 0 : index
    %c0_2 = arith.constant 0 : index
    %1 = vector.load %arg2[%c0_1, %c0_2] : memref<1024x128xbf16, #tpu.memory_space<vmem>>, vector<1024x128xbf16>
    %cst = arith.constant dense<0.000000e+00> : vector<16x128xf32>
    %2 = tpu.matmul %0, %1, %cst {dimension_numbers = #tpu.dot_dimension_numbers<[1], [0], [0], [1], [0, 0, 1, 1], [], []>} : vector<16x1024xbf16>, vector<1024x128xbf16>, vector<16x128xf32> -> vector<16x128xf32>
    %c0_3 = arith.constant 0 : index
    %c0_4 = arith.constant 0 : index
    %3 = vector.load %arg3[%c0_3, %c0_4] : memref<1x128xf32, #tpu.memory_space<vmem>>, vector<1x128xf32>
    %4 = vector.broadcast %3 : vector<1x128xf32> to vector<16x128xf32>
    %5 = arith.addf %2, %4 : vector<16x128xf32>
    %c0_5 = arith.constant 0 : index
    %c0_6 = arith.constant 0 : index
    %6 = vector.load %arg4[%c0_5, %c0_6] : memref<128x64xf32, #tpu.memory_space<vmem>>, vector<128x64xf32>
    %cst_7 = arith.constant dense<0.000000e+00> : vector<16x64xf32>
    %7 = tpu.matmul %5, %6, %cst_7 {dimension_numbers = #tpu.dot_dimension_numbers<[1], [0], [0], [1], [0, 0, 1, 1], [], []>} : vector<16x128xf32>, vector<128x64xf32>, vector<16x64xf32> -> vector<16x64xf32>
    %c0_8 = arith.constant 0 : index
    %c0_9 = arith.constant 0 : index
    %8 = vector.load %arg5[%c0_8, %c0_9] : memref<1x64xf32, #tpu.memory_space<vmem>>, vector<1x64xf32>
    %9 = vector.broadcast %8 : vector<1x64xf32> to vector<16x64xf32>
    %10 = arith.addf %7, %9 : vector<16x64xf32>
    %c0_10 = arith.constant 0 : index
    %c0_11 = arith.constant 0 : index
    %11 = vector.load %arg6[%c0_10, %c0_11] : memref<16x64xf32, #tpu.memory_space<vmem>>, vector<16x64xf32>
    tpu.vector_store %arg6[%c0_10, %c0_11], %10 {strides = array<i32>} : memref<16x64xf32, #tpu.memory_space<vmem>>, vector<16x64xf32>,
    return
  }
  func.func @transform_0(%arg0: i32) -> (i32, i32) {
    %c0_i32 = arith.constant 0 : i32
    %c0_i32_0 = arith.constant 0 : i32
    return %arg0, %c0_i32 : i32, i32
  }
  func.func @transform_1(%arg0: i32) -> (i32, i32) {
    %c0_i32 = arith.constant 0 : i32
    %c0_i32_0 = arith.constant 0 : i32
    %c0_i32_1 = arith.constant 0 : i32
    return %c0_i32, %c0_i32_0 : i32, i32
  }
  func.func @transform_2(%arg0: i32) -> (i32, i32) {
    %c0_i32 = arith.constant 0 : i32
    %c0_i32_0 = arith.constant 0 : i32
    %c0_i32_1 = arith.constant 0 : i32
    return %c0_i32, %c0_i32_0 : i32, i32
  }
  func.func @transform_3(%arg0: i32) -> (i32, i32) {
    %c0_i32 = arith.constant 0 : i32
    %c0_i32_0 = arith.constant 0 : i32
    %c0_i32_1 = arith.constant 0 : i32
    return %c0_i32, %c0_i32_0 : i32, i32
  }
  func.func @transform_4(%arg0: i32) -> (i32, i32) {
    %c0_i32 = arith.constant 0 : i32
    %c0_i32_0 = arith.constant 0 : i32
    %c0_i32_1 = arith.constant 0 : i32
    return %c0_i32, %c0_i32_0 : i32, i32
  }
  func.func @transform_5(%arg0: i32) -> (i32, i32) {
    %c0_i32 = arith.constant 0 : i32
    %c0_i32_0 = arith.constant 0 : i32
    return %arg0, %c0_i32 : i32, i32
  }
}

module attributes {stable_mosaic.version = 11 : i64} {
  func.func @_head_kernel(%arg0: memref<8x64xf32, #tpu.memory_space<vmem>>, %arg1: memref<1x64xf32, #tpu.memory_space<vmem>>, %arg2: memref<1x64xf32, #tpu.memory_space<vmem>>, %arg3: memref<1x64xf32, #tpu.memory_space<vmem>>, %arg4: memref<1x1xf32, #tpu.memory_space<vmem>>, %arg5: memref<8x1xf32, #tpu.memory_space<vmem>>, %arg6: memref<8x1xf32, #tpu.memory_space<vmem>>, %arg7: memref<1x1xf32, #tpu.memory_space<vmem>>) attributes {dimension_semantics = [], scalar_prefetch = 0 : i64, scratch_operands = 0 : i64, tpu.core_type = #tpu.core_type<tc>} {
    %c0 = arith.constant 0 : index
    %c0_0 = arith.constant 0 : index
    %0 = vector.load %arg0[%c0, %c0_0] : memref<8x64xf32, #tpu.memory_space<vmem>>, vector<8x64xf32>
    %cst = arith.constant dense<0.000000e+00> : vector<64xf32>
    %1 = vector.multi_reduction <add>, %0, %cst [0] : vector<8x64xf32> to vector<64xf32>
    %2 = vector.shape_cast %1 : vector<64xf32> to vector<1x64xf32>
    %cst_1 = arith.constant 8.000000e+00 : f32
    %3 = vector.broadcast %cst_1 : f32 to vector<1x64xf32>
    %4 = arith.divf %2, %3 : vector<1x64xf32>
    %5 = vector.broadcast %4 : vector<1x64xf32> to vector<8x64xf32>
    %6 = arith.subf %0, %5 : vector<8x64xf32>
    %7 = arith.mulf %6, %6 : vector<8x64xf32>
    %cst_2 = arith.constant dense<0.000000e+00> : vector<64xf32>
    %8 = vector.multi_reduction <add>, %7, %cst_2 [0] : vector<8x64xf32> to vector<64xf32>
    %9 = vector.shape_cast %8 : vector<64xf32> to vector<1x64xf32>
    %cst_3 = arith.constant 8.000000e+00 : f32
    %10 = vector.broadcast %cst_3 : f32 to vector<1x64xf32>
    %11 = arith.divf %9, %10 : vector<1x64xf32>
    %12 = vector.broadcast %4 : vector<1x64xf32> to vector<8x64xf32>
    %13 = arith.subf %0, %12 : vector<8x64xf32>
    %cst_4 = arith.constant 9.99999974E-6 : f32
    %14 = vector.broadcast %cst_4 : f32 to vector<1x64xf32>
    %15 = arith.addf %11, %14 : vector<1x64xf32>
    %16 = math.rsqrt %15 : vector<1x64xf32>
    %17 = vector.broadcast %16 : vector<1x64xf32> to vector<8x64xf32>
    %18 = arith.mulf %13, %17 : vector<8x64xf32>
    %c0_5 = arith.constant 0 : index
    %c0_6 = arith.constant 0 : index
    %19 = vector.load %arg1[%c0_5, %c0_6] : memref<1x64xf32, #tpu.memory_space<vmem>>, vector<1x64xf32>
    %20 = vector.broadcast %19 : vector<1x64xf32> to vector<8x64xf32>
    %21 = arith.mulf %18, %20 : vector<8x64xf32>
    %c0_7 = arith.constant 0 : index
    %c0_8 = arith.constant 0 : index
    %22 = vector.load %arg2[%c0_7, %c0_8] : memref<1x64xf32, #tpu.memory_space<vmem>>, vector<1x64xf32>
    %23 = vector.broadcast %22 : vector<1x64xf32> to vector<8x64xf32>
    %24 = arith.addf %21, %23 : vector<8x64xf32>
    %cst_9 = arith.constant 0.000000e+00 : f32
    %25 = vector.broadcast %cst_9 : f32 to vector<8x64xf32>
    %26 = arith.maximumf %24, %25 : vector<8x64xf32>
    %c0_10 = arith.constant 0 : index
    %c0_11 = arith.constant 0 : index
    %27 = vector.load %arg3[%c0_10, %c0_11] : memref<1x64xf32, #tpu.memory_space<vmem>>, vector<1x64xf32>
    %28 = vector.broadcast %27 : vector<1x64xf32> to vector<8x64xf32>
    %29 = arith.mulf %26, %28 : vector<8x64xf32>
    %cst_12 = arith.constant dense<0.000000e+00> : vector<8xf32>
    %30 = vector.multi_reduction <add>, %29, %cst_12 [1] : vector<8x64xf32> to vector<8xf32>
    %31 = vector.shape_cast %30 : vector<8xf32> to vector<8x1xf32>
    %c0_13 = arith.constant 0 : index
    %c0_14 = arith.constant 0 : index
    %32 = vector.load %arg4[%c0_13, %c0_14] : memref<1x1xf32, #tpu.memory_space<vmem>>, vector<1x1xf32>
    %33 = vector.broadcast %32 : vector<1x1xf32> to vector<8x1xf32>
    %34 = arith.addf %31, %33 : vector<8x1xf32>
    %cst_15 = arith.constant 0.000000e+00 : f32
    %35 = vector.broadcast %cst_15 : f32 to vector<8x1xf32>
    %36 = arith.subf %35, %34 : vector<8x1xf32>
    %37 = math.exp %36 : vector<8x1xf32>
    %cst_16 = arith.constant 1.000000e+00 : f32
    %38 = vector.broadcast %cst_16 : f32 to vector<8x1xf32>
    %39 = arith.addf %38, %37 : vector<8x1xf32>
    %40 = tpu.reciprocal %39 {approx = true} : vector<8x1xf32> -> vector<8x1xf32>
    %cst_17 = arith.constant 0.000000e+00 : f32
    %cst_18 = arith.constant 1.000000e+00 : f32
    %41 = vector.broadcast %cst_17 : f32 to vector<8x1xf32>
    %42 = arith.maximumf %41, %40 : vector<8x1xf32>
    %43 = vector.broadcast %cst_18 : f32 to vector<8x1xf32>
    %44 = arith.minimumf %43, %42 : vector<8x1xf32>
    %c0_19 = arith.constant 0 : index
    %c0_20 = arith.constant 0 : index
    %45 = vector.load %arg6[%c0_19, %c0_20] : memref<8x1xf32, #tpu.memory_space<vmem>>, vector<8x1xf32>
    tpu.vector_store %arg6[%c0_19, %c0_20], %44 {strides = array<i32>} : memref<8x1xf32, #tpu.memory_space<vmem>>, vector<8x1xf32>,
    %c0_21 = arith.constant 0 : index
    %c0_22 = arith.constant 0 : index
    %46 = vector.load %arg5[%c0_21, %c0_22] : memref<8x1xf32, #tpu.memory_space<vmem>>, vector<8x1xf32>
    %47 = math.log %44 : vector<8x1xf32>
    %cst_23 = arith.constant -1.000000e+02 : f32
    %48 = vector.broadcast %cst_23 : f32 to vector<8x1xf32>
    %49 = arith.maximumf %47, %48 : vector<8x1xf32>
    %cst_24 = arith.constant 1.000000e+00 : f32
    %50 = vector.broadcast %cst_24 : f32 to vector<8x1xf32>
    %51 = arith.subf %50, %44 : vector<8x1xf32>
    %52 = math.log %51 : vector<8x1xf32>
    %cst_25 = arith.constant -1.000000e+02 : f32
    %53 = vector.broadcast %cst_25 : f32 to vector<8x1xf32>
    %54 = arith.maximumf %52, %53 : vector<8x1xf32>
    %55 = arith.mulf %46, %49 : vector<8x1xf32>
    %cst_26 = arith.constant 1.000000e+00 : f32
    %56 = vector.broadcast %cst_26 : f32 to vector<8x1xf32>
    %57 = arith.subf %56, %46 : vector<8x1xf32>
    %58 = arith.mulf %57, %54 : vector<8x1xf32>
    %59 = arith.addf %55, %58 : vector<8x1xf32>
    %cst_27 = arith.constant 0.000000e+00 : f32
    %60 = vector.broadcast %cst_27 : f32 to vector<8x1xf32>
    %61 = arith.subf %60, %59 : vector<8x1xf32>
    %cst_28 = arith.constant dense<0.000000e+00> : vector<1xf32>
    %62 = vector.multi_reduction <add>, %61, %cst_28 [0] : vector<8x1xf32> to vector<1xf32>
    %63 = vector.shape_cast %62 : vector<1xf32> to vector<1x1xf32>
    %cst_29 = arith.constant 8.000000e+00 : f32
    %64 = vector.broadcast %cst_29 : f32 to vector<1x1xf32>
    %65 = arith.divf %63, %64 : vector<1x1xf32>
    %c0_30 = arith.constant 0 : index
    %c0_31 = arith.constant 0 : index
    %66 = vector.load %arg7[%c0_30, %c0_31] : memref<1x1xf32, #tpu.memory_space<vmem>>, vector<1x1xf32>
    tpu.vector_store %arg7[%c0_30, %c0_31], %65 {strides = array<i32>} : memref<1x1xf32, #tpu.memory_space<vmem>>, vector<1x1xf32>,
    return
  }
}

</mosaic_0001>

<llo_original>
// kernel: mymodel_forward.3
$region0: #{mymodel_forward.3}
  #allocation0 [shape = 'u32[]', space=smem, size = 0x4, offset = 0x4, fixed_abs, tag = 'smem constant byte address 0x4 - core index']
  #allocation1 [shape = 'u32[144,128]{1,0:T(1,128)}', space=vmem, size = 0x12000, scoped, tag = 'internal scratch']
  #allocation2 [shape = 'f32[1,1]{1,0:T(1,128)S(1)}', space=vmem, size = 0x200, scoped, tag = 'scoped memory for mymodel_forward.3']
  %s0 = inlined_call_operand.vmem [shape: f32[8,64], index: 0, kind: input, shape index: {}]
  %s1 = inlined_call_operand.vmem [shape: f32[1,64], index: 1, kind: input, shape index: {}]
  %s2 = inlined_call_operand.vmem [shape: f32[1,64], index: 2, kind: input, shape index: {}]
  %s3 = inlined_call_operand.vmem [shape: f32[1,64], index: 3, kind: input, shape index: {}]
  %s4 = inlined_call_operand.<no memory space> [shape: f32[1,1], index: 4, kind: input, shape index: {}]
  %s5 = inlined_call_operand.vmem [shape: f32[8,1], index: 5, kind: input, shape index: {}]
  %s6 = inlined_call_operand.vmem [shape: f32[8,1], index: 6, kind: output, shape index: {0}]
  %s7 = inlined_call_operand.hbm [shape: f32[1,1], index: 7, kind: output, shape index: {1}]
  %8 = xla_tuple %s6, %s7
  %s9 = sld [smem:[#allocation0]]
  $region42: #{mymodel_forward.3} parent=0
    _
  %s11 = ssub.s32 1, %s9
  %s12 = scalar_select 0, %s11, %s9
  %v13 = vstv %s4
  %14 = vst [vmem:[#allocation2] sm:$0x1] %v13
  $region1: #{mymodel_forward.3} parent=0
    #allocation3 [shape = 'u8[512]{0}', space=vmem, size = 0x400, scoped, tag = 'output window, operand 1, single buffered']
    #allocation4 [shape = 's32[1]{0}', space=sflag, size = 0x4, scoped, tag = 'scoped memory for mymodel_forward.3']
    %15 = vsyncpa [#allocation4], 0
    // Predicated region
    $region2: #{mymodel_forward.3} parent=1 // pred_check
      _
    $region3: #{mymodel_forward.3} parent=1 // pred_check_branch
      %17 = sbr.rel (0) target = $region5
    $region4: #{mymodel_forward.3} parent=1 // pred_region
      _
    $region5: #{mymodel_forward.3} parent=1 // pred_fallthru
      _
    // Predicated region
    $region6: #{mymodel_forward.3} parent=1 // pred_check
      _
    $region7: #{mymodel_forward.3} parent=1 // pred_check_branch
      %19 = sbr.rel (0) target = $region9
    $region8: #{mymodel_forward.3} parent=1 // pred_region
      _
    $region9: #{mymodel_forward.3} parent=1 // pred_fallthru
      _
    // Predicated region
    $region10: #{mymodel_forward.3} parent=1 // pred_check
      _
    $region11: #{mymodel_forward.3} parent=1 // pred_check_branch
      %21 = sbr.rel (0) target = $region13
    $region12: #{mymodel_forward.3} parent=1 // pred_region
      _
    $region13: #{mymodel_forward.3} parent=1 // pred_fallthru
      _
    // Predicated region
    $region14: #{mymodel_forward.3} parent=1 // pred_check
      _
    $region15: #{mymodel_forward.3} parent=1 // pred_check_branch
      %23 = sbr.rel (0) target = $region17
    $region16: #{mymodel_forward.3} parent=1 // pred_region
      _
    $region17: #{mymodel_forward.3} parent=1 // pred_fallthru
      _
    // Predicated region
    $region18: #{mymodel_forward.3} parent=1 // pred_check
      _
    $region19: #{mymodel_forward.3} parent=1 // pred_check_branch
      %25 = sbr.rel (0) target = $region21
    $region20: #{mymodel_forward.3} parent=1 // pred_region
      _
    $region21: #{mymodel_forward.3} parent=1 // pred_fallthru
      _
    // Predicated region
    $region22: #{mymodel_forward.3} parent=1 // pred_check
      _
    $region23: #{mymodel_forward.3} parent=1 // pred_check_branch
      %27 = sbr.rel (0) target = $region25
    $region24: #{mymodel_forward.3} parent=1 // pred_region
      _
    $region25: #{mymodel_forward.3} parent=1 // pred_fallthru
      _
    %v28 = vld [vmem:[%s0] sm:$0xff]
    %vm29 = vcmask 523264
    %v30 = vsel %vm29, %v28, 0.0
    %v31 = vrot.slane %v30, 4
    %v32 = vadd.f32 %v30, %v31
    %v33 = vrot.slane %v32, 2
    %v34 = vadd.f32 %v32, %v33
    %v35 = vrot.slane %v34, 1
    %v36 = vadd.f32 %v34, %v35
    %v37 = vrcp.pop 8.0
    %v38 = vmul.f32 %v36, %v37
    %v39 = vsub.f32 %v28, %v38
    %v40 = vmul.f32 %v39, %v39
    %v41 = vsel %vm29, %v40, 0.0
    %v42 = vrot.slane %v41, 4
    %v43 = vadd.f32 %v41, %v42
    %v44 = vrot.slane %v43, 2
    %v45 = vadd.f32 %v43, %v44
    %v46 = vrot.slane %v45, 1
    %v47 = vadd.f32 %v45, %v46
    %v48 = vmul.f32 %v47, %v37
    %v49 = vadd.f32 %v48, 1e-05
    %v50 = vrsqrt.pop %v49
    %v51 = vmul.f32 %v39, %v50
    %v52 = vld [vmem:[%s1] sm:$0x1]
    %v54 = vlaneseq
    %v55 = vshrl.u32 %v54, 7
    %v56 = vsub.s32 0, %v55
    %v57 = vrot.slane %v52, %v56
    %v59 = vmul.f32 %v51, %v57
    %v60 = vld [vmem:[%s2] sm:$0x1]
    %v62 = vlaneseq
    %v63 = vshrl.u32 %v62, 7
    %v64 = vsub.s32 0, %v63
    %v65 = vrot.slane %v60, %v64
    %v67 = vadd.f32 %v59, %v65
    %v68 = vmax.f32 %v67, 0.0
    %v69 = vld [vmem:[%s3] sm:$0x1]
    %v71 = vlaneseq
    %v72 = vshrl.u32 %v71, 7
    %v73 = vsub.s32 0, %v72
    %v74 = vrot.slane %v69, %v73
    %v76 = vmul.f32 %v68, %v74
    %v77 = vsel %vm29, %v76, 0.0
    %78 = vadd.xlane.f32.xlu0 %v77
    %v79 = vpop.xlane.xlu0 %78
    %v80 = vld [vmem:[#allocation2] sm:$0x1]
    %v82 = vlaneseq
    %v83 = vshrl.u32 %v82, 7
    %v84 = vsub.s32 0, %v83
    %v85 = vrot.slane %v80, %v84
    %v87 = vadd.f32 %v79, %v85
    %v88 = vsub.f32 0.0, %v87
    %v89 = vmul.f32 %v88, 1.442695
    %v90 = vpow.pop %v89
    %v91 = vadd.f32 %v90, 1.0
    %v92 = vrcp.pop %v91
    %v93 = vmax.f32 %v92, 0.0
    %v94 = vmin.f32 %v93, 1.0
    %vm95 = vcmask 7168
    %96 = vst.msk [vmem:[%s6] sm:$0xff] %vm95, %v94
    %v97 = vld [vmem:[%s5] sm:$0xff]
    %v98 = vlog2.pop %v94
    %v99 = vmul.f32 %v98, 0.6931472
    %v100 = vmax.f32 %v99, -100.0
    %v101 = vsub.f32 1.0, %v94
    %v102 = vlog2.pop %v101
    %v103 = vmul.f32 %v102, 0.6931472
    %v104 = vmax.f32 %v103, -100.0
    %v105 = vmul.f32 %v97, %v100
    %v106 = vsub.f32 1.0, %v97
    %v107 = vmul.f32 %v106, %v104
    %v108 = vadd.f32 %v105, %v107
    %v109 = vsub.f32 0.0, %v108
    %v110 = vsel %vm95, %v109, 0.0
    %v111 = vrot.slane %v110, 4
    %v112 = vadd.f32 %v110, %v111
    %v113 = vrot.slane %v112, 2
    %v114 = vadd.f32 %v112, %v113
    %v115 = vrot.slane %v114, 1
    %v116 = vadd.f32 %v114, %v115
    %v117 = vmul.f32 %v116, %v37
    %vm118 = vcmask 0
    %119 = vst.msk [vmem:[#allocation3] sm:$0x1] %vm118, %v117
    // Predicated region
    $region26: #{mymodel_forward.3} parent=1 // pred_check
      _
    $region27: #{mymodel_forward.3} parent=1 // pred_check_branch
      %121 = sbr.rel (0) target = $region29
    $region28: #{mymodel_forward.3} parent=1 // pred_region
      _
    $region29: #{mymodel_forward.3} parent=1 // pred_fallthru
      _
    // Predicated region
    $region30: #{mymodel_forward.3} parent=1 // pred_check
      _
    $region31: #{mymodel_forward.3} parent=1 // pred_check_branch
      %123 = sbr.rel (0) target = $region33
    $region32: #{mymodel_forward.3} parent=1 // pred_region
      %s125 = ssub.s32 16, 16
      %126 = vsyncadd [#allocation4], %s125
      %s128 = sshll.u32 [#allocation3], 4
      %s129 = int_to_ptr.vmem [resolvable:$true] %s128
      %131 = dma.vmem_to_hbm [thread:$0]  %s129, 16, %s7, [#allocation4]
    $region33: #{mymodel_forward.3} parent=1 // pred_fallthru
      _
    // Predicated region
    $region34: #{mymodel_forward.3} parent=1 // pred_check
      _
    $region35: #{mymodel_forward.3} parent=1 // pred_check_branch
      %133 = sbr.rel (0) target = $region37
    $region36: #{mymodel_forward.3} parent=1 // pred_region
      _
    $region37: #{mymodel_forward.3} parent=1 // pred_fallthru
      _
    // Predicated region
    $region38: #{mymodel_forward.3} parent=1 // pred_check
      _
    $region39: #{mymodel_forward.3} parent=1 // pred_check_branch
      %135 = sbr.rel (0) target = $region41
    $region40: #{mymodel_forward.3} parent=1 // pred_region
      %136 = dma.done [#allocation4], 16
    $region41: #{mymodel_forward.3} parent=1 // pred_fallthru
      _
    %137 = vsyncpa [#allocation4], 1

// kernel: mymodel_forward.2
$region0: #{mymodel_forward.2}
  #allocation0 [shape = 'u32[]', space=smem, size = 0x4, offset = 0x4, fixed_abs, tag = 'smem constant byte address 0x4 - core index']
  #allocation1 [shape = 'u32[144,128]{1,0:T(1,128)}', space=vmem, size = 0x12000, scoped, tag = 'internal scratch']
  %s0 = inlined_call_operand.vmem [shape: bf16[8,1024], index: 0, kind: input, shape index: {}]
  %s1 = inlined_call_operand.vmem [shape: bf16[1024,128], index: 1, kind: input, shape index: {}]
  %s2 = inlined_call_operand.vmem [shape: f32[1,128], index: 2, kind: input, shape index: {}]
  %s3 = inlined_call_operand.vmem [shape: f32[128,64], index: 3, kind: input, shape index: {}]
  %s4 = inlined_call_operand.vmem [shape: f32[1,64], index: 4, kind: input, shape index: {}]
  %s5 = inlined_call_operand.vmem [shape: f32[8,64], index: 5, kind: output, shape index: {}]
  %s6 = sld [smem:[#allocation0]]
  $region64: #{mymodel_forward.2} parent=0
    _
  %s8 = ssub.s32 1, %s6
  %s9 = scalar_select 0, %s8, %s6
  $region1: #{mymodel_forward.2} parent=0
    #allocation2 [shape = 'u8[8192]{0}', space=vmem, size = 0x2000, scoped, tag = 'output window, operand 0, single buffered']
    // Predicated region
    $region2: #{mymodel_forward.2} parent=1 // pred_check
      _
    $region3: #{mymodel_forward.2} parent=1 // pred_check_branch
      %11 = sbr.rel (0) target = $region5
    $region4: #{mymodel_forward.2} parent=1 // pred_region
      _
    $region5: #{mymodel_forward.2} parent=1 // pred_fallthru
      _
    // Predicated region
    $region6: #{mymodel_forward.2} parent=1 // pred_check
      _
    $region7: #{mymodel_forward.2} parent=1 // pred_check_branch
      %13 = sbr.rel (0) target = $region9
    $region8: #{mymodel_forward.2} parent=1 // pred_region
      _
    $region9: #{mymodel_forward.2} parent=1 // pred_fallthru
      _
    // Predicated region
    $region10: #{mymodel_forward.2} parent=1 // pred_check
      _
    $region11: #{mymodel_forward.2} parent=1 // pred_check_branch
      %15 = sbr.rel (0) target = $region13
    $region12: #{mymodel_forward.2} parent=1 // pred_region
      _
    $region13: #{mymodel_forward.2} parent=1 // pred_fallthru
      _
    // Predicated region
    $region14: #{mymodel_forward.2} parent=1 // pred_check
      _
    $region15: #{mymodel_forward.2} parent=1 // pred_check_branch
      %17 = sbr.rel (0) target = $region17
    $region16: #{mymodel_forward.2} parent=1 // pred_region
      _
    $region17: #{mymodel_forward.2} parent=1 // pred_fallthru
      _
    // Predicated region
    $region18: #{mymodel_forward.2} parent=1 // pred_check
      _
    $region19: #{mymodel_forward.2} parent=1 // pred_check_branch
      %19 = sbr.rel (0) target = $region21
    $region20: #{mymodel_forward.2} parent=1 // pred_region
      _
    $region21: #{mymodel_forward.2} parent=1 // pred_fallthru
      _
    %v21 = vld [vmem:[%s0] sm:$0xff]
    %v22 = vld [vmem:[%s0 + $0x8] sm:$0xff]
    %v23 = vld [vmem:[%s0 + $0x10] sm:$0xff]
    %v24 = vld [vmem:[%s0 + $0x18] sm:$0xff]
    %v25 = vld [vmem:[%s0 + $0x20] sm:$0xff]
    %v26 = vld [vmem:[%s0 + $0x28] sm:$0xff]
    %v27 = vld [vmem:[%s0 + $0x30] sm:$0xff]
    %v28 = vld [vmem:[%s0 + $0x38] sm:$0xff]
    %v29 = vld [vmem:[%s1] sm:$0xf]
    %v30 = vld [vmem:[%s1 + $0x4] sm:$0xf]
    %v31 = vld [vmem:[%s1 + $0x8] sm:$0xf]
    %v32 = vld [vmem:[%s1 + $0xc] sm:$0xf]
    %v33 = vld [vmem:[%s1 + $0x10] sm:$0xf]
    %v34 = vld [vmem:[%s1 + $0x14] sm:$0xf]
    %v35 = vld [vmem:[%s1 + $0x18] sm:$0xf]
    %v36 = vld [vmem:[%s1 + $0x1c] sm:$0xf]
    %v37 = vld [vmem:[%s1 + $0x20] sm:$0xf]
    %v38 = vld [vmem:[%s1 + $0x24] sm:$0xf]
    %v39 = vld [vmem:[%s1 + $0x28] sm:$0xf]
    %v40 = vld [vmem:[%s1 + $0x2c] sm:$0xf]
    %v41 = vld [vmem:[%s1 + $0x30] sm:$0xf]
    %v42 = vld [vmem:[%s1 + $0x34] sm:$0xf]
    %v43 = vld [vmem:[%s1 + $0x38] sm:$0xf]
    %v44 = vld [vmem:[%s1 + $0x3c] sm:$0xf]
    %v45 = vld [vmem:[%s1 + $0x40] sm:$0xf]
    %v46 = vld [vmem:[%s1 + $0x44] sm:$0xf]
    %v47 = vld [vmem:[%s1 + $0x48] sm:$0xf]
    %v48 = vld [vmem:[%s1 + $0x4c] sm:$0xf]
    %v49 = vld [vmem:[%s1 + $0x50] sm:$0xf]
    %v50 = vld [vmem:[%s1 + $0x54] sm:$0xf]
    %v51 = vld [vmem:[%s1 + $0x58] sm:$0xf]
    %v52 = vld [vmem:[%s1 + $0x5c] sm:$0xf]
    %v53 = vld [vmem:[%s1 + $0x60] sm:$0xf]
    %v54 = vld [vmem:[%s1 + $0x64] sm:$0xf]
    %v55 = vld [vmem:[%s1 + $0x68] sm:$0xf]
    %v56 = vld [vmem:[%s1 + $0x6c] sm:$0xf]
    %v57 = vld [vmem:[%s1 + $0x70] sm:$0xf]
    %v58 = vld [vmem:[%s1 + $0x74] sm:$0xf]
    %v59 = vld [vmem:[%s1 + $0x78] sm:$0xf]
    %v60 = vld [vmem:[%s1 + $0x7c] sm:$0xf]
    %v61 = vld [vmem:[%s1 + $0x80] sm:$0xf]
    %v62 = vld [vmem:[%s1 + $0x84] sm:$0xf]
    %v63 = vld [vmem:[%s1 + $0x88] sm:$0xf]
    %v64 = vld [vmem:[%s1 + $0x8c] sm:$0xf]
    %v65 = vld [vmem:[%s1 + $0x90] sm:$0xf]
    %v66 = vld [vmem:[%s1 + $0x94] sm:$0xf]
    %v67 = vld [vmem:[%s1 + $0x98] sm:$0xf]
    %v68 = vld [vmem:[%s1 + $0x9c] sm:$0xf]
    %v69 = vld [vmem:[%s1 + $0xa0] sm:$0xf]
    %v70 = vld [vmem:[%s1 + $0xa4] sm:$0xf]
    %v71 = vld [vmem:[%s1 + $0xa8] sm:$0xf]
    %v72 = vld [vmem:[%s1 + $0xac] sm:$0xf]
    %v73 = vld [vmem:[%s1 + $0xb0] sm:$0xf]
    %v74 = vld [vmem:[%s1 + $0xb4] sm:$0xf]
    %v75 = vld [vmem:[%s1 + $0xb8] sm:$0xf]
    %v76 = vld [vmem:[%s1 + $0xbc] sm:$0xf]
    %v77 = vld [vmem:[%s1 + $0xc0] sm:$0xf]
    %v78 = vld [vmem:[%s1 + $0xc4] sm:$0xf]
    %v79 = vld [vmem:[%s1 + $0xc8] sm:$0xf]
    %v80 = vld [vmem:[%s1 + $0xcc] sm:$0xf]
    %v81 = vld [vmem:[%s1 + $0xd0] sm:$0xf]
    %v82 = vld [vmem:[%s1 + $0xd4] sm:$0xf]
    %v83 = vld [vmem:[%s1 + $0xd8] sm:$0xf]
    %v84 = vld [vmem:[%s1 + $0xdc] sm:$0xf]
    %v85 = vld [vmem:[%s1 + $0xe0] sm:$0xf]
    %v86 = vld [vmem:[%s1 + $0xe4] sm:$0xf]
    %v87 = vld [vmem:[%s1 + $0xe8] sm:$0xf]
    %v88 = vld [vmem:[%s1 + $0xec] sm:$0xf]
    %v89 = vld [vmem:[%s1 + $0xf0] sm:$0xf]
    %v90 = vld [vmem:[%s1 + $0xf4] sm:$0xf]
    %v91 = vld [vmem:[%s1 + $0xf8] sm:$0xf]
    %v92 = vld [vmem:[%s1 + $0xfc] sm:$0xf]
    %v93 = vld [vmem:[%s1 + $0x100] sm:$0xf]
    %v94 = vld [vmem:[%s1 + $0x104] sm:$0xf]
    %v95 = vld [vmem:[%s1 + $0x108] sm:$0xf]
    %v96 = vld [vmem:[%s1 + $0x10c] sm:$0xf]
    %v97 = vld [vmem:[%s1 + $0x110] sm:$0xf]
    %v98 = vld [vmem:[%s1 + $0x114] sm:$0xf]
    %v99 = vld [vmem:[%s1 + $0x118] sm:$0xf]
    %v100 = vld [vmem:[%s1 + $0x11c] sm:$0xf]
    %v101 = vld [vmem:[%s1 + $0x120] sm:$0xf]
    %v102 = vld [vmem:[%s1 + $0x124] sm:$0xf]
    %v103 = vld [vmem:[%s1 + $0x128] sm:$0xf]
    %v104 = vld [vmem:[%s1 + $0x12c] sm:$0xf]
    %v105 = vld [vmem:[%s1 + $0x130] sm:$0xf]
    %v106 = vld [vmem:[%s1 + $0x134] sm:$0xf]
    %v107 = vld [vmem:[%s1 + $0x138] sm:$0xf]
    %v108 = vld [vmem:[%s1 + $0x13c] sm:$0xf]
    %v109 = vld [vmem:[%s1 + $0x140] sm:$0xf]
    %v110 = vld [vmem:[%s1 + $0x144] sm:$0xf]
    %v111 = vld [vmem:[%s1 + $0x148] sm:$0xf]
    %v112 = vld [vmem:[%s1 + $0x14c] sm:$0xf]
    %v113 = vld [vmem:[%s1 + $0x150] sm:$0xf]
    %v114 = vld [vmem:[%s1 + $0x154] sm:$0xf]
    %v115 = vld [vmem:[%s1 + $0x158] sm:$0xf]
    %v116 = vld [vmem:[%s1 + $0x15c] sm:$0xf]
    %v117 = vld [vmem:[%s1 + $0x160] sm:$0xf]
    %v118 = vld [vmem:[%s1 + $0x164] sm:$0xf]
    %v119 = vld [vmem:[%s1 + $0x168] sm:$0xf]
    %v120 = vld [vmem:[%s1 + $0x16c] sm:$0xf]
    %v121 = vld [vmem:[%s1 + $0x170] sm:$0xf]
    %v122 = vld [vmem:[%s1 + $0x174] sm:$0xf]
    %v123 = vld [vmem:[%s1 + $0x178] sm:$0xf]
    %v124 = vld [vmem:[%s1 + $0x17c] sm:$0xf]
    %v125 = vld [vmem:[%s1 + $0x180] sm:$0xf]
    %v126 = vld [vmem:[%s1 + $0x184] sm:$0xf]
    %v127 = vld [vmem:[%s1 + $0x188] sm:$0xf]
    %v128 = vld [vmem:[%s1 + $0x18c] sm:$0xf]
    %v129 = vld [vmem:[%s1 + $0x190] sm:$0xf]
    %v130 = vld [vmem:[%s1 + $0x194] sm:$0xf]
    %v131 = vld [vmem:[%s1 + $0x198] sm:$0xf]
    %v132 = vld [vmem:[%s1 + $0x19c] sm:$0xf]
    %v133 = vld [vmem:[%s1 + $0x1a0] sm:$0xf]
    %v134 = vld [vmem:[%s1 + $0x1a4] sm:$0xf]
    %v135 = vld [vmem:[%s1 + $0x1a8] sm:$0xf]
    %v136 = vld [vmem:[%s1 + $0x1ac] sm:$0xf]
    %v137 = vld [vmem:[%s1 + $0x1b0] sm:$0xf]
    %v138 = vld [vmem:[%s1 + $0x1b4] sm:$0xf]
    %v139 = vld [vmem:[%s1 + $0x1b8] sm:$0xf]
    %v140 = vld [vmem:[%s1 + $0x1bc] sm:$0xf]
    %v141 = vld [vmem:[%s1 + $0x1c0] sm:$0xf]
    %v142 = vld [vmem:[%s1 + $0x1c4] sm:$0xf]
    %v143 = vld [vmem:[%s1 + $0x1c8] sm:$0xf]
    %v144 = vld [vmem:[%s1 + $0x1cc] sm:$0xf]
    %v145 = vld [vmem:[%s1 + $0x1d0] sm:$0xf]
    %v146 = vld [vmem:[%s1 + $0x1d4] sm:$0xf]
    %v147 = vld [vmem:[%s1 + $0x1d8] sm:$0xf]
    %v148 = vld [vmem:[%s1 + $0x1dc] sm:$0xf]
    %v149 = vld [vmem:[%s1 + $0x1e0] sm:$0xf]
    %v150 = vld [vmem:[%s1 + $0x1e4] sm:$0xf]
    %v151 = vld [vmem:[%s1 + $0x1e8] sm:$0xf]
    %v152 = vld [vmem:[%s1 + $0x1ec] sm:$0xf]
    %v153 = vld [vmem:[%s1 + $0x1f0] sm:$0xf]
    %v154 = vld [vmem:[%s1 + $0x1f4] sm:$0xf]
    %v155 = vld [vmem:[%s1 + $0x1f8] sm:$0xf]
    %v156 = vld [vmem:[%s1 + $0x1fc] sm:$0xf]
    %v157 = vld [vmem:[%s2] sm:$0x1]
    %v159 = vlaneseq
    %v160 = vshrl.u32 %v159, 7
    %v161 = vsub.s32 0, %v160
    %v162 = vrot.slane %v157, %v161
    %v172 = vunpack.c.l.b16 %v21
    %v173 = vunpack.c.h.b16 %v21
    %v174 = vunpack.c.l.b16 %v22
    %v175 = vunpack.c.h.b16 %v22
    %v176 = vunpack.c.l.b16 %v23
    %v177 = vunpack.c.h.b16 %v23
    %v178 = vunpack.c.l.b16 %v24
    %v179 = vunpack.c.h.b16 %v24
    %v180 = vunpack.c.l.b16 %v25
    %v181 = vunpack.c.h.b16 %v25
    %v182 = vunpack.c.l.b16 %v26
    %v183 = vunpack.c.h.b16 %v26
    %v184 = vunpack.c.l.b16 %v27
    %v185 = vunpack.c.h.b16 %v27
    %v186 = vunpack.c.l.b16 %v28
    %v187 = vunpack.c.h.b16 %v28
    %v188 = vpack.c.b16 %v180, %v172
    %v189 = vpack.c.b16 %v181, %v173
    %v190 = vpack.c.b16 %v182, %v174
    %v191 = vpack.c.b16 %v183, %v175
    %v192 = vpack.c.b16 %v184, %v176
    %v193 = vpack.c.b16 %v185, %v177
    %v194 = vpack.c.b16 %v186, %v178
    %v195 = vpack.c.b16 %v187, %v179
    %v332 = vunpack.c.l.b16 %v29
    %v333 = vunpack.c.l.b16 %v30
    %v334 = vunpack.c.l.b16 %v31
    %v335 = vunpack.c.l.b16 %v32
    %v336 = vunpack.c.l.b16 %v33
    %v337 = vunpack.c.l.b16 %v34
    %v338 = vunpack.c.l.b16 %v35
    %v339 = vunpack.c.l.b16 %v36
    %v340 = vunpack.c.l.b16 %v37
    %v341 = vunpack.c.l.b16 %v38
    %v342 = vunpack.c.l.b16 %v39
    %v343 = vunpack.c.l.b16 %v40
    %v344 = vunpack.c.l.b16 %v41
    %v345 = vunpack.c.l.b16 %v42
    %v346 = vunpack.c.l.b16 %v43
    %v347 = vunpack.c.l.b16 %v44
    %v348 = vunpack.c.l.b16 %v45
    %v349 = vunpack.c.l.b16 %v46
    %v350 = vunpack.c.l.b16 %v47
    %v351 = vunpack.c.l.b16 %v48
    %v352 = vunpack.c.l.b16 %v49
    %v353 = vunpack.c.l.b16 %v50
    %v354 = vunpack.c.l.b16 %v51
    %v355 = vunpack.c.l.b16 %v52
    %v356 = vunpack.c.l.b16 %v53
    %v357 = vunpack.c.l.b16 %v54
    %v358 = vunpack.c.l.b16 %v55
    %v359 = vunpack.c.l.b16 %v56
    %v360 = vunpack.c.l.b16 %v57
    %v361 = vunpack.c.l.b16 %v58
    %v362 = vunpack.c.l.b16 %v59
    %v363 = vunpack.c.l.b16 %v60
    %v364 = vunpack.c.l.b16 %v61
    %v365 = vunpack.c.l.b16 %v62
    %v366 = vunpack.c.l.b16 %v63
    %v367 = vunpack.c.l.b16 %v64
    %v368 = vunpack.c.l.b16 %v65
    %v369 = vunpack.c.l.b16 %v66
    %v370 = vunpack.c.l.b16 %v67
    %v371 = vunpack.c.l.b16 %v68
    %v372 = vunpack.c.l.b16 %v69
    %v373 = vunpack.c.l.b16 %v70
    %v374 = vunpack.c.l.b16 %v71
    %v375 = vunpack.c.l.b16 %v72
    %v376 = vunpack.c.l.b16 %v73
    %v377 = vunpack.c.l.b16 %v74
    %v378 = vunpack.c.l.b16 %v75
    %v379 = vunpack.c.l.b16 %v76
    %v380 = vunpack.c.l.b16 %v77
    %v381 = vunpack.c.l.b16 %v78
    %v382 = vunpack.c.l.b16 %v79
    %v383 = vunpack.c.l.b16 %v80
    %v384 = vunpack.c.l.b16 %v81
    %v385 = vunpack.c.l.b16 %v82
    %v386 = vunpack.c.l.b16 %v83
    %v387 = vunpack.c.l.b16 %v84
    %v388 = vunpack.c.l.b16 %v85
    %v389 = vunpack.c.l.b16 %v86
    %v390 = vunpack.c.l.b16 %v87
    %v391 = vunpack.c.l.b16 %v88
    %v392 = vunpack.c.l.b16 %v89
    %v393 = vunpack.c.l.b16 %v90
    %v394 = vunpack.c.l.b16 %v91
    %v395 = vunpack.c.l.b16 %v92
    %v396 = vunpack.c.l.b16 %v93
    %v397 = vunpack.c.l.b16 %v94
    %v398 = vunpack.c.l.b16 %v95
    %v399 = vunpack.c.l.b16 %v96
    %v400 = vunpack.c.l.b16 %v97
    %v401 = vunpack.c.l.b16 %v98
    %v402 = vunpack.c.l.b16 %v99
    %v403 = vunpack.c.l.b16 %v100
    %v404 = vunpack.c.l.b16 %v101
    %v405 = vunpack.c.l.b16 %v102
    %v406 = vunpack.c.l.b16 %v103
    %v407 = vunpack.c.l.b16 %v104
    %v408 = vunpack.c.l.b16 %v105
    %v409 = vunpack.c.l.b16 %v106
    %v410 = vunpack.c.l.b16 %v107
    %v411 = vunpack.c.l.b16 %v108
    %v412 = vunpack.c.l.b16 %v109
    %v413 = vunpack.c.l.b16 %v110
    %v414 = vunpack.c.l.b16 %v111
    %v415 = vunpack.c.l.b16 %v112
    %v416 = vunpack.c.l.b16 %v113
    %v417 = vunpack.c.l.b16 %v114
    %v418 = vunpack.c.l.b16 %v115
    %v419 = vunpack.c.l.b16 %v116
    %v420 = vunpack.c.l.b16 %v117
    %v421 = vunpack.c.l.b16 %v118
    %v422 = vunpack.c.l.b16 %v119
    %v423 = vunpack.c.l.b16 %v120
    %v424 = vunpack.c.l.b16 %v121
    %v425 = vunpack.c.l.b16 %v122
    %v426 = vunpack.c.l.b16 %v123
    %v427 = vunpack.c.l.b16 %v124
    %v428 = vunpack.c.l.b16 %v125
    %v429 = vunpack.c.l.b16 %v126
    %v430 = vunpack.c.l.b16 %v127
    %v431 = vunpack.c.l.b16 %v128
    %v432 = vunpack.c.l.b16 %v129
    %v433 = vunpack.c.l.b16 %v130
    %v434 = vunpack.c.l.b16 %v131
    %v435 = vunpack.c.l.b16 %v132
    %v436 = vunpack.c.l.b16 %v133
    %v437 = vunpack.c.l.b16 %v134
    %v438 = vunpack.c.l.b16 %v135
    %v439 = vunpack.c.l.b16 %v136
    %v440 = vunpack.c.l.b16 %v137
    %v441 = vunpack.c.l.b16 %v138
    %v442 = vunpack.c.l.b16 %v139
    %v443 = vunpack.c.l.b16 %v140
    %v444 = vunpack.c.l.b16 %v141
    %v445 = vunpack.c.l.b16 %v142
    %v446 = vunpack.c.l.b16 %v143
    %v447 = vunpack.c.l.b16 %v144
    %v448 = vunpack.c.l.b16 %v145
    %v449 = vunpack.c.l.b16 %v146
    %v450 = vunpack.c.l.b16 %v147
    %v451 = vunpack.c.l.b16 %v148
    %v452 = vunpack.c.l.b16 %v149
    %v453 = vunpack.c.l.b16 %v150
    %v454 = vunpack.c.l.b16 %v151
    %v455 = vunpack.c.l.b16 %v152
    %v456 = vunpack.c.l.b16 %v153
    %v457 = vunpack.c.l.b16 %v154
    %v458 = vunpack.c.l.b16 %v155
    %v459 = vunpack.c.l.b16 %v156
    %v460 = vpack.c.b16 %v333, %v332
    %v461 = vpack.c.b16 %v335, %v334
    %v462 = vpack.c.b16 %v337, %v336
    %v463 = vpack.c.b16 %v339, %v338
    %v464 = vpack.c.b16 %v341, %v340
    %v465 = vpack.c.b16 %v343, %v342
    %v466 = vpack.c.b16 %v345, %v344
    %v467 = vpack.c.b16 %v347, %v346
    %v468 = vpack.c.b16 %v349, %v348
    %v469 = vpack.c.b16 %v351, %v350
    %v470 = vpack.c.b16 %v353, %v352
    %v471 = vpack.c.b16 %v355, %v354
    %v472 = vpack.c.b16 %v357, %v356
    %v473 = vpack.c.b16 %v359, %v358
    %v474 = vpack.c.b16 %v361, %v360
    %v475 = vpack.c.b16 %v363, %v362
    %v476 = vpack.c.b16 %v365, %v364
    %v477 = vpack.c.b16 %v367, %v366
    %v478 = vpack.c.b16 %v369, %v368
    %v479 = vpack.c.b16 %v371, %v370
    %v480 = vpack.c.b16 %v373, %v372
    %v481 = vpack.c.b16 %v375, %v374
    %v482 = vpack.c.b16 %v377, %v376
    %v483 = vpack.c.b16 %v379, %v378
    %v484 = vpack.c.b16 %v381, %v380
    %v485 = vpack.c.b16 %v383, %v382
    %v486 = vpack.c.b16 %v385, %v384
    %v487 = vpack.c.b16 %v387, %v386
    %v488 = vpack.c.b16 %v389, %v388
    %v489 = vpack.c.b16 %v391, %v390
    %v490 = vpack.c.b16 %v393, %v392
    %v491 = vpack.c.b16 %v395, %v394
    %v492 = vpack.c.b16 %v397, %v396
    %v493 = vpack.c.b16 %v399, %v398
    %v494 = vpack.c.b16 %v401, %v400
    %v495 = vpack.c.b16 %v403, %v402
    %v496 = vpack.c.b16 %v405, %v404
    %v497 = vpack.c.b16 %v407, %v406
    %v498 = vpack.c.b16 %v409, %v408
    %v499 = vpack.c.b16 %v411, %v410
    %v500 = vpack.c.b16 %v413, %v412
    %v501 = vpack.c.b16 %v415, %v414
    %v502 = vpack.c.b16 %v417, %v416
    %v503 = vpack.c.b16 %v419, %v418
    %v504 = vpack.c.b16 %v421, %v420
    %v505 = vpack.c.b16 %v423, %v422
    %v506 = vpack.c.b16 %v425, %v424
    %v507 = vpack.c.b16 %v427, %v426
    %v508 = vpack.c.b16 %v429, %v428
    %v509 = vpack.c.b16 %v431, %v430
    %v510 = vpack.c.b16 %v433, %v432
    %v511 = vpack.c.b16 %v435, %v434
    %v512 = vpack.c.b16 %v437, %v436
    %v513 = vpack.c.b16 %v439, %v438
    %v514 = vpack.c.b16 %v441, %v440
    %v515 = vpack.c.b16 %v443, %v442
    %v516 = vpack.c.b16 %v445, %v444
    %v517 = vpack.c.b16 %v447, %v446
    %v518 = vpack.c.b16 %v449, %v448
    %v519 = vpack.c.b16 %v451, %v450
    %v520 = vpack.c.b16 %v453, %v452
    %v521 = vpack.c.b16 %v455, %v454
    %v522 = vpack.c.b16 %v457, %v456
    %v523 = vpack.c.b16 %v459, %v458
    %588 = vmatprep.subr.bf16.mxu0 0
    %589 = vmatpush1.bf16.msra.mxu0 %v467
    %590 = vmatprep.subr.bf16.mxu0 0
    %591 = vmatpush1.bf16.msra.mxu0 %v466
    %592 = vmatprep.subr.bf16.mxu0 0
    %593 = vmatpush1.bf16.msra.mxu0 %v465
    %594 = vmatprep.subr.bf16.mxu0 0
    %595 = vmatpush1.bf16.msra.mxu0 %v464
    %596 = vmatprep.subr.bf16.mxu0 0
    %597 = vmatpush1.bf16.msra.mxu0 %v463
    %598 = vmatprep.subr.bf16.mxu0 0
    %599 = vmatpush1.bf16.msra.mxu0 %v462
    %600 = vmatprep.subr.bf16.mxu0 0
    %601 = vmatpush1.bf16.msra.mxu0 %v461
    %602 = vmatprep.subr.bf16.mxu0 0
    %603 = vmatpush1.bf16.msra.mxu0 %v460
    %604 = vmatprep.subr.bf16.mxu0 0
    %605 = vmatpush2.bf16.msra.mxu0 %v475
    %606 = vmatprep.subr.bf16.mxu0 0
    %607 = vmatpush2.bf16.msra.mxu0 %v474
    %608 = vmatprep.subr.bf16.mxu0 0
    %609 = vmatpush2.bf16.msra.mxu0 %v473
    %610 = vmatprep.subr.bf16.mxu0 0
    %611 = vmatpush2.bf16.msra.mxu0 %v472
    %612 = vmatprep.subr.bf16.mxu0 0
    %613 = vmatpush2.bf16.msra.mxu0 %v471
    %614 = vmatprep.subr.bf16.mxu0 0
    %615 = vmatpush2.bf16.msra.mxu0 %v470
    %616 = vmatprep.subr.bf16.mxu0 0
    %617 = vmatpush2.bf16.msra.mxu0 %v469
    %618 = vmatprep.subr.bf16.mxu0 0
    %619 = vmatpush2.bf16.msra.mxu0 %v468
    %620 = vmatprep.mubr.bf16.mxu0 %v189
    %621 = vmatmul.mubr.bf16.gmra.mxu0 %v188
    %v622 = vpop.f32.mrf.mxu0
    %v623 = vadd.f32 %v162, %v622
    %v624 = vpop.f32.mrf.mxu0
    %v625 = vpop.f32.mrf.mxu0
    %v626 = vadd.f32 %v162, %v625
    %v627 = vpop.f32.mrf.mxu0
    %628 = vdwg.mxu0
    %629 = vmatprep.subr.bf16.mxu0 0
    %630 = vmatpush1.bf16.msra.mxu0 %v483
    %631 = vmatprep.subr.bf16.mxu0 0
    %632 = vmatpush1.bf16.msra.mxu0 %v482
    %633 = vmatprep.subr.bf16.mxu0 0
    %634 = vmatpush1.bf16.msra.mxu0 %v481
    %635 = vmatprep.subr.bf16.mxu0 0
    %636 = vmatpush1.bf16.msra.mxu0 %v480
    %637 = vmatprep.subr.bf16.mxu0 0
    %638 = vmatpush1.bf16.msra.mxu0 %v479
    %639 = vmatprep.subr.bf16.mxu0 0
    %640 = vmatpush1.bf16.msra.mxu0 %v478
    %641 = vmatprep.subr.bf16.mxu0 0
    %642 = vmatpush1.bf16.msra.mxu0 %v477
    %643 = vmatprep.subr.bf16.mxu0 0
    %644 = vmatpush1.bf16.msra.mxu0 %v476
    %645 = vmatprep.subr.bf16.mxu0 0
    %646 = vmatpush2.bf16.msra.mxu0 %v491
    %647 = vmatprep.subr.bf16.mxu0 0
    %648 = vmatpush2.bf16.msra.mxu0 %v490
    %649 = vmatprep.subr.bf16.mxu0 0
    %650 = vmatpush2.bf16.msra.mxu0 %v489
    %651 = vmatprep.subr.bf16.mxu0 0
    %652 = vmatpush2.bf16.msra.mxu0 %v488
    %653 = vmatprep.subr.bf16.mxu0 0
    %654 = vmatpush2.bf16.msra.mxu0 %v487
    %655 = vmatprep.subr.bf16.mxu0 0
    %656 = vmatpush2.bf16.msra.mxu0 %v486
    %657 = vmatprep.subr.bf16.mxu0 0
    %658 = vmatpush2.bf16.msra.mxu0 %v485
    %659 = vmatprep.subr.bf16.mxu0 0
    %660 = vmatpush2.bf16.msra.mxu0 %v484
    %661 = vmatprep.mubr.bf16.mxu0 %v191
    %662 = vmatmul.mubr.bf16.gmra.mxu0 %v190
    %v663 = vpop.f32.mrf.mxu0
    %v664 = vadd.f32 %v623, %v663
    %v665 = vpop.f32.mrf.mxu0
    %v666 = vpop.f32.mrf.mxu0
    %v667 = vadd.f32 %v626, %v666
    %v668 = vpop.f32.mrf.mxu0
    %669 = vdwg.mxu0
    %670 = vmatprep.subr.bf16.mxu0 0
    %671 = vmatpush1.bf16.msra.mxu0 %v499
    %672 = vmatprep.subr.bf16.mxu0 0
    %673 = vmatpush1.bf16.msra.mxu0 %v498
    %674 = vmatprep.subr.bf16.mxu0 0
    %675 = vmatpush1.bf16.msra.mxu0 %v497
    %676 = vmatprep.subr.bf16.mxu0 0
    %677 = vmatpush1.bf16.msra.mxu0 %v496
    %678 = vmatprep.subr.bf16.mxu0 0
    %679 = vmatpush1.bf16.msra.mxu0 %v495
    %680 = vmatprep.subr.bf16.mxu0 0
    %681 = vmatpush1.bf16.msra.mxu0 %v494
    %682 = vmatprep.subr.bf16.mxu0 0
    %683 = vmatpush1.bf16.msra.mxu0 %v493
    %684 = vmatprep.subr.bf16.mxu0 0
    %685 = vmatpush1.bf16.msra.mxu0 %v492
    %686 = vmatprep.subr.bf16.mxu0 0
    %687 = vmatpush2.bf16.msra.mxu0 %v507
    %688 = vmatprep.subr.bf16.mxu0 0
    %689 = vmatpush2.bf16.msra.mxu0 %v506
    %690 = vmatprep.subr.bf16.mxu0 0
    %691 = vmatpush2.bf16.msra.mxu0 %v505
    %692 = vmatprep.subr.bf16.mxu0 0
    %693 = vmatpush2.bf16.msra.mxu0 %v504
    %694 = vmatprep.subr.bf16.mxu0 0
    %695 = vmatpush2.bf16.msra.mxu0 %v503
    %696 = vmatprep.subr.bf16.mxu0 0
    %697 = vmatpush2.bf16.msra.mxu0 %v502
    %698 = vmatprep.subr.bf16.mxu0 0
    %699 = vmatpush2.bf16.msra.mxu0 %v501
    %700 = vmatprep.subr.bf16.mxu0 0
    %701 = vmatpush2.bf16.msra.mxu0 %v500
    %702 = vmatprep.mubr.bf16.mxu0 %v193
    %703 = vmatmul.mubr.bf16.gmra.mxu0 %v192
    %v704 = vpop.f32.mrf.mxu0
    %v705 = vadd.f32 %v664, %v704
    %v706 = vpop.f32.mrf.mxu0
    %v707 = vpop.f32.mrf.mxu0
    %v708 = vadd.f32 %v667, %v707
    %v709 = vpop.f32.mrf.mxu0
    %710 = vdwg.mxu0
    %711 = vmatprep.subr.bf16.mxu0 0
    %712 = vmatpush1.bf16.msra.mxu0 %v515
    %713 = vmatprep.subr.bf16.mxu0 0
    %714 = vmatpush1.bf16.msra.mxu0 %v514
    %715 = vmatprep.subr.bf16.mxu0 0
    %716 = vmatpush1.bf16.msra.mxu0 %v513
    %717 = vmatprep.subr.bf16.mxu0 0
    %718 = vmatpush1.bf16.msra.mxu0 %v512
    %719 = vmatprep.subr.bf16.mxu0 0
    %720 = vmatpush1.bf16.msra.mxu0 %v511
    %721 = vmatprep.subr.bf16.mxu0 0
    %722 = vmatpush1.bf16.msra.mxu0 %v510
    %723 = vmatprep.subr.bf16.mxu0 0
    %724 = vmatpush1.bf16.msra.mxu0 %v509
    %725 = vmatprep.subr.bf16.mxu0 0
    %726 = vmatpush1.bf16.msra.mxu0 %v508
    %727 = vmatprep.subr.bf16.mxu0 0
    %728 = vmatpush2.bf16.msra.mxu0 %v523
    %729 = vmatprep.subr.bf16.mxu0 0
    %730 = vmatpush2.bf16.msra.mxu0 %v522
    %731 = vmatprep.subr.bf16.mxu0 0
    %732 = vmatpush2.bf16.msra.mxu0 %v521
    %733 = vmatprep.subr.bf16.mxu0 0
    %734 = vmatpush2.bf16.msra.mxu0 %v520
    %735 = vmatprep.subr.bf16.mxu0 0
    %736 = vmatpush2.bf16.msra.mxu0 %v519
    %737 = vmatprep.subr.bf16.mxu0 0
    %738 = vmatpush2.bf16.msra.mxu0 %v518
    %739 = vmatprep.subr.bf16.mxu0 0
    %740 = vmatpush2.bf16.msra.mxu0 %v517
    %741 = vmatprep.subr.bf16.mxu0 0
    %742 = vmatpush2.bf16.msra.mxu0 %v516
    %743 = vmatprep.mubr.bf16.mxu0 %v195
    %744 = vmatmul.mubr.bf16.gmra.mxu0 %v194
    %v745 = vpop.f32.mrf.mxu0
    %v746 = vadd.f32 %v705, %v745
    %v747 = vpop.f32.mrf.mxu0
    %v748 = vpop.f32.mrf.mxu0
    %v749 = vadd.f32 %v708, %v748
    %v750 = vpop.f32.mrf.mxu0
    %751 = vdwg.mxu0
    %v752 = vld [vmem:[%s3] sm:$0xff]
    %v753 = vld [vmem:[%s3 + $0x8] sm:$0xff]
    %v754 = vld [vmem:[%s3 + $0x10] sm:$0xff]
    %v755 = vld [vmem:[%s3 + $0x18] sm:$0xff]
    %v756 = vld [vmem:[%s3 + $0x20] sm:$0xff]
    %v757 = vld [vmem:[%s3 + $0x28] sm:$0xff]
    %v758 = vld [vmem:[%s3 + $0x30] sm:$0xff]
    %v759 = vld [vmem:[%s3 + $0x38] sm:$0xff]
    %v760 = vld [vmem:[%s3 + $0x40] sm:$0xff]
    %v761 = vld [vmem:[%s3 + $0x48] sm:$0xff]
    %v762 = vld [vmem:[%s3 + $0x50] sm:$0xff]
    %v763 = vld [vmem:[%s3 + $0x58] sm:$0xff]
    %v764 = vld [vmem:[%s3 + $0x60] sm:$0xff]
    %v765 = vld [vmem:[%s3 + $0x68] sm:$0xff]
    %v766 = vld [vmem:[%s3 + $0x70] sm:$0xff]
    %v767 = vld [vmem:[%s3 + $0x78] sm:$0xff]
    %v768 = vld [vmem:[%s4] sm:$0x1]
    %v770 = vlaneseq
    %v771 = vshrl.u32 %v770, 7
    %v772 = vsub.s32 0, %v771
    %v773 = vrot.slane %v768, %v772
    %775 = vmatprep.subr.mxu0 0.0
    %776 = vmatpush1.msra.mxu0 %v767
    %777 = vmatprep.subr.mxu0 0.0
    %778 = vmatpush1.msra.mxu0 %v766
    %779 = vmatprep.subr.mxu0 0.0
    %780 = vmatpush1.msra.mxu0 %v765
    %781 = vmatprep.subr.mxu0 0.0
    %782 = vmatpush1.msra.mxu0 %v764
    %783 = vmatprep.subr.mxu0 0.0
    %784 = vmatpush1.msra.mxu0 %v763
    %785 = vmatprep.subr.mxu0 0.0
    %786 = vmatpush1.msra.mxu0 %v762
    %787 = vmatprep.subr.mxu0 0.0
    %788 = vmatpush1.msra.mxu0 %v761
    %789 = vmatprep.subr.mxu0 0.0
    %790 = vmatpush1.msra.mxu0 %v760
    %791 = vmatprep.subr.mxu0 0.0
    %792 = vmatpush1.msra.mxu0 %v759
    %793 = vmatprep.subr.mxu0 0.0
    %794 = vmatpush1.msra.mxu0 %v758
    %795 = vmatprep.subr.mxu0 0.0
    %796 = vmatpush1.msra.mxu0 %v757
    %797 = vmatprep.subr.mxu0 0.0
    %798 = vmatpush1.msra.mxu0 %v756
    %799 = vmatprep.subr.mxu0 0.0
    %800 = vmatpush1.msra.mxu0 %v755
    %801 = vmatprep.subr.mxu0 0.0
    %802 = vmatpush1.msra.mxu0 %v754
    %803 = vmatprep.subr.mxu0 0.0
    %804 = vmatpush1.msra.mxu0 %v753
    %805 = vmatprep.subr.mxu0 0.0
    %806 = vmatpush1.msra.mxu0 %v752
    %807 = vmatprep.subr.mxu0 0.0
    %808 = vmatpush2.msra.mxu0 0.0
    %809 = vmatprep.subr.mxu0 0.0
    %810 = vmatpush2.msra.mxu0 0.0
    %811 = vmatprep.subr.mxu0 0.0
    %812 = vmatpush2.msra.mxu0 0.0
    %813 = vmatprep.subr.mxu0 0.0
    %814 = vmatpush2.msra.mxu0 0.0
    %815 = vmatprep.subr.mxu0 0.0
    %816 = vmatpush2.msra.mxu0 0.0
    %817 = vmatprep.subr.mxu0 0.0
    %818 = vmatpush2.msra.mxu0 0.0
    %819 = vmatprep.subr.mxu0 0.0
    %820 = vmatpush2.msra.mxu0 0.0
    %821 = vmatprep.subr.mxu0 0.0
    %822 = vmatpush2.msra.mxu0 0.0
    %823 = vmatprep.subr.mxu0 0.0
    %824 = vmatpush2.msra.mxu0 0.0
    %825 = vmatprep.subr.mxu0 0.0
    %826 = vmatpush2.msra.mxu0 0.0
    %827 = vmatprep.subr.mxu0 0.0
    %828 = vmatpush2.msra.mxu0 0.0
    %829 = vmatprep.subr.mxu0 0.0
    %830 = vmatpush2.msra.mxu0 0.0
    %831 = vmatprep.subr.mxu0 0.0
    %832 = vmatpush2.msra.mxu0 0.0
    %833 = vmatprep.subr.mxu0 0.0
    %834 = vmatpush2.msra.mxu0 0.0
    %835 = vmatprep.subr.mxu0 0.0
    %836 = vmatpush2.msra.mxu0 0.0
    %837 = vmatprep.subr.mxu0 0.0
    %838 = vmatpush2.msra.mxu0 0.0
    %839 = vmatprep.mubr.f32.mxu0 0.0
    %840 = vmatmul.mubr.f32.gmra.mxu0 %v746
    %v841 = vpop.f32.mrf.mxu0
    %v842 = vadd.f32 %v773, %v841
    %v843 = vpop.f32.mrf.mxu0
    %844 = vmatprep.mubr.f32.mxu0 0.0
    %845 = vmatmul.mubr.f32.gmra.mxu0 %v749
    %v846 = vpop.f32.mrf.mxu0
    %v847 = vadd.f32 %v773, %v846
    %v848 = vpop.f32.mrf.mxu0
    %849 = vdwg.mxu0
    %vm850 = vcmask 523264
    %851 = vst.msk [vmem:[#allocation2] sm:$0xff] %vm850, %v842
    %852 = vst.msk [vmem:[#allocation2 + $0x8] sm:$0xff] %vm850, %v847
    // Predicated region
    $region22: #{mymodel_forward.2} parent=1 // pred_check
      _
    $region23: #{mymodel_forward.2} parent=1 // pred_check_branch
      %854 = sbr.rel (0) target = $region25
    $region24: #{mymodel_forward.2} parent=1 // pred_region
      // Predicated region
      $region26: #{mymodel_forward.2} parent=24 // pred_check
        _
      $region27: #{mymodel_forward.2} parent=24 // pred_check_branch
        %856 = sbr.rel (0) target = $region29
      $region28: #{mymodel_forward.2} parent=24 // pred_region
        // Predicated region
        $region30: #{mymodel_forward.2} parent=28 // pred_check
          _
        $region31: #{mymodel_forward.2} parent=28 // pred_check_branch
          %858 = sbr.rel (0) target = $region33
        $region32: #{mymodel_forward.2} parent=28 // pred_region
          // Predicated region
          $region45: #{mymodel_forward.2} parent=32 // pred_check
            _
          $region46: #{mymodel_forward.2} parent=32 // pred_check_branch
            %874 = sbr.rel (0) target = $region48
          $region47: #{mymodel_forward.2} parent=32 // pred_region
            loop: start=0, step=1, limit=1
            $region49: #{mymodel_forward.2} parent=47 // loop_pre_header
              _
            $region50: #{mymodel_forward.2} parent=47 // loop_header
              %s876 = sphi 0, %s880
              %p877 = scmp.ge.s32.totalorder %s876, 1
              %s881 = sphi [#allocation2], [#allocation2]
              %s882 = sphi %s5, %s5
            $region51: #{mymodel_forward.2} parent=47 // loop_header_branch
              %879 = sbr.rel (%p877) target = $region55
            $region52: #{mymodel_forward.2} parent=47 // loop_body
              %v883 = vld [vmem:[%s881] sm:$0xff]
              %884 = vst [vmem:[%s882] sm:$0xff] %v883
            $region53: #{mymodel_forward.2} parent=47 // loop_footer
              %s880 = sadd.s32 1, %s876
            $region54: #{mymodel_forward.2} parent=47 // loop_footer_branch
              %875 = sbr.rel target = $region50
            $region55: #{mymodel_forward.2} parent=47 // loop_exit
              _
          $region48: #{mymodel_forward.2} parent=32 // pred_fallthru
            _
          // Predicated region
          $region56: #{mymodel_forward.2} parent=32 // pred_check
            _
          $region57: #{mymodel_forward.2} parent=32 // pred_check_branch
            %886 = sbr.rel target = $region59
          $region58: #{mymodel_forward.2} parent=32 // pred_region
            _
          $region59: #{mymodel_forward.2} parent=32 // pred_fallthru
            _
        $region33: #{mymodel_forward.2} parent=28 // pred_fallthru
          _
        // Predicated region
        $region34: #{mymodel_forward.2} parent=28 // pred_check
          _
        $region35: #{mymodel_forward.2} parent=28 // pred_check_branch
          %860 = sbr.rel target = $region37
        $region36: #{mymodel_forward.2} parent=28 // pred_region
          %s862 = ssub.s32 256, 1
          loop: start=0, step=1, limit=1
          $region38: #{mymodel_forward.2} parent=36 // loop_pre_header
            _
          $region39: #{mymodel_forward.2} parent=36 // loop_header
            %s864 = sphi 0, %s868
            %p865 = scmp.ge.s32.totalorder %s864, 1
            %s869 = sphi [#allocation2], [#allocation2]
            %s870 = sphi %s5, %s5
          $region40: #{mymodel_forward.2} parent=36 // loop_header_branch
            %867 = sbr.rel (%p865) target = $region44
          $region41: #{mymodel_forward.2} parent=36 // loop_body
            %v871 = vld [vmem:[%s869] sm:%s862]
            %872 = vst [vmem:[%s870] sm:%s862] %v871
          $region42: #{mymodel_forward.2} parent=36 // loop_footer
            %s868 = sadd.s32 1, %s864
          $region43: #{mymodel_forward.2} parent=36 // loop_footer_branch
            %863 = sbr.rel target = $region39
          $region44: #{mymodel_forward.2} parent=36 // loop_exit
            _
        $region37: #{mymodel_forward.2} parent=28 // pred_fallthru
          _
      $region29: #{mymodel_forward.2} parent=24 // pred_fallthru
        _
      %887 = vnop
    $region25: #{mymodel_forward.2} parent=1 // pred_fallthru
      _
    // Predicated region
    $region60: #{mymodel_forward.2} parent=1 // pred_check
      _
    $region61: #{mymodel_forward.2} parent=1 // pred_check_branch
      %889 = sbr.rel (0) target = $region63
    $region62: #{mymodel_forward.2} parent=1 // pred_region
      _
    $region63: #{mymodel_forward.2} parent=1 // pred_fallthru
      _

</llo_original>
